<compile_context>
chip_gen: v5e
topology: v5e:2x2
jax: 0.10.0
libtpu: 0.0.40
codegen_flags: <defaults>
</compile_context>

<pallas_src>
import jax
import jax.numpy as jnp
from jax.experimental import pallas as pl
from jax.experimental.pallas import tpu as pltpu

N_STATES = 4      # CartPole observation_space.shape[0]
N_ACTIONS = 2     # CartPole action_space.n
HIDDEN = 50
HIDDEN_PAD = 64   # zero-padded hidden width (sublane/lane friendly)


def _round_up(x, m):
    return (x + m - 1) // m * m


def net_kernel(x_ref, w1_ref, b1_ref, w2_ref, b2_ref, q_ref, act_ref):
    # x: (tb, N_STATES); w1: (N_STATES, HIDDEN_PAD) pre-transposed, zero-padded.
    x = x_ref[...]
    h = jnp.dot(x, w1_ref[...], preferred_element_type=jnp.float32) + b1_ref[...]
    h = jnp.maximum(h, 0.0)                                   # (tb, HIDDEN_PAD)
    # out layer: (tb, HIDDEN_PAD) @ (HIDDEN_PAD, N_ACTIONS) + (1, N_ACTIONS)
    q = jnp.dot(h, w2_ref[...], preferred_element_type=jnp.float32) + b2_ref[...]
    q_ref[...] = q                                            # (tb, N_ACTIONS)
    # Fused greedy-action selection (argmax over actions, ties -> lowest index)
    # so DQN choose_action needs no extra XLA op after the kernel.
    best = jnp.max(q, axis=-1, keepdims=True)
    idx = jax.lax.broadcasted_iota(jnp.int32, q.shape, 1)
    act_ref[...] = jnp.min(jnp.where(q == best, idx, N_ACTIONS),
                           axis=-1, keepdims=True)


def net_forward(x, params, *, max_block_b=128):
    """Returns (actions_value (B, N_ACTIONS) f32, greedy_action (B,) i32)."""
    w1, b1, w2, b2 = params  # pre-transposed / padded, see pack_params
    B = x.shape[0]
    tb = min(max_block_b, _round_up(B, 8))    # sublane-multiple batch tile
    Bp = _round_up(B, tb)
    if Bp != B:
        x = jnp.pad(x, ((0, Bp - B), (0, 0)))

    const = lambda i: (0, 0)                  # weights: same block every step
    q, act = pl.pallas_call(
        net_kernel,
        out_shape=(
            jax.ShapeDtypeStruct((Bp, N_ACTIONS), jnp.float32),
            jax.ShapeDtypeStruct((Bp, 1), jnp.int32),
        ),
        grid=(Bp // tb,),
        in_specs=[
            pl.BlockSpec((tb, N_STATES), lambda i: (i, 0)),        # x
            pl.BlockSpec((N_STATES, HIDDEN_PAD), const),           # w1 (packed)
            pl.BlockSpec((1, HIDDEN_PAD), const),                  # b1 (packed)
            pl.BlockSpec((HIDDEN_PAD, N_ACTIONS), const),          # w2 (packed)
            pl.BlockSpec((1, N_ACTIONS), const),                   # b2
        ],
        out_specs=(
            pl.BlockSpec((tb, N_ACTIONS), lambda i: (i, 0)),       # Q-values
            pl.BlockSpec((tb, 1), lambda i: (i, 0)),               # greedy act
        ),
        compiler_params=pltpu.CompilerParams(
            dimension_semantics=("parallel",)),
    )(x, w1, b1, w2, b2)
    return q[:B], act[:B, 0]


def init_torch_style_params(key):
    """PyTorch-layout params: weight.normal_(0, 0.1), default bias init."""
    k1, k2, k3, k4 = jax.random.split(key, 4)
    w1 = 0.1 * jax.random.normal(k1, (HIDDEN, N_STATES), dtype=jnp.float32)
    bound1 = 1.0 / jnp.sqrt(jnp.float32(N_STATES))
    b1 = jax.random.uniform(k2, (1, HIDDEN), minval=-bound1, maxval=bound1,
                            dtype=jnp.float32)
    w2 = 0.1 * jax.random.normal(k3, (N_ACTIONS, HIDDEN), dtype=jnp.float32)
    bound2 = 1.0 / jnp.sqrt(jnp.float32(HIDDEN))
    b2 = jax.random.uniform(k4, (1, N_ACTIONS), minval=-bound2, maxval=bound2,
                            dtype=jnp.float32)
    return w1, b1, w2, b2


def pack_params(w1, b1, w2, b2):
    """One-time layout plumbing: transpose + zero-pad HIDDEN 50 -> 64."""
    w1_t = jnp.zeros((N_STATES, HIDDEN_PAD), jnp.float32).at[:, :HIDDEN].set(w1.T)
    b1_p = jnp.zeros((1, HIDDEN_PAD), jnp.float32).at[:, :HIDDEN].set(b1)
    w2_t = jnp.zeros((HIDDEN_PAD, N_ACTIONS), jnp.float32).at[:HIDDEN, :].set(w2.T)
    return w1_t, b1_p, w2_t, b2


if __name__ == "__main__":
    key = jax.random.PRNGKey(0)
    pkey, xkey = jax.random.split(key)
    w1, b1, w2, b2 = init_torch_style_params(pkey)
    params = pack_params(w1, b1, w2, b2)

    B = 2
    x = jax.random.normal(xkey, (B, N_STATES), dtype=jnp.float32)

    actions_value, greedy_action = net_forward(x, params)
    jax.block_until_ready(actions_value)
    jax.block_until_ready(greedy_action)

    # Pure-JAX reference of the original PyTorch forward pass.
    ref = jnp.maximum(x @ w1.T + b1, 0.0) @ w2.T + b2
    assert actions_value.shape == (B, N_ACTIONS)
    assert jnp.allclose(actions_value, ref, atol=1e-5, rtol=1e-5)
    assert greedy_action.shape == (B,)
    assert jnp.array_equal(greedy_action, jnp.argmax(ref, axis=-1).astype(jnp.int32))

    print("KERNEL_OK")
</pallas_src>

<mosaic_0001>
module attributes {stable_mosaic.version = 11 : i64} {
  func.func @net_kernel(%arg0: i32, %arg1: memref<8x4xf32, #tpu.memory_space<vmem>>, %arg2: memref<4x64xf32, #tpu.memory_space<vmem>>, %arg3: memref<1x64xf32, #tpu.memory_space<vmem>>, %arg4: memref<64x2xf32, #tpu.memory_space<vmem>>, %arg5: memref<1x2xf32, #tpu.memory_space<vmem>>, %arg6: memref<8x2xf32, #tpu.memory_space<vmem>>, %arg7: memref<8x1xi32, #tpu.memory_space<vmem>>) attributes {dimension_semantics = [#tpu.dimension_semantics<parallel>], iteration_bounds = array<i64: 1>, scalar_prefetch = 0 : i64, scratch_operands = 0 : i64, tpu.core_type = #tpu.core_type<tc>, window_params = [{transform_indices = @transform_0, window_bounds = array<i64: 8, 4>}, {pipeline_mode = #tpu.pipeline_mode<synchronous>, transform_indices = @transform_1, window_bounds = array<i64: 4, 64>}, {pipeline_mode = #tpu.pipeline_mode<synchronous>, transform_indices = @transform_2, window_bounds = array<i64: 1, 64>}, {pipeline_mode = #tpu.pipeline_mode<synchronous>, transform_indices = @transform_3, window_bounds = array<i64: 64, 2>}, {pipeline_mode = #tpu.pipeline_mode<synchronous>, transform_indices = @transform_4, window_bounds = array<i64: 1, 2>}, {transform_indices = @transform_5, window_bounds = array<i64: 8, 2>}, {transform_indices = @transform_6, window_bounds = array<i64: 8, 1>}]} {
    %c0 = arith.constant 0 : index
    %c0_0 = arith.constant 0 : index
    %0 = vector.load %arg1[%c0, %c0_0] : memref<8x4xf32, #tpu.memory_space<vmem>>, vector<8x4xf32>
    %c0_1 = arith.constant 0 : index
    %c0_2 = arith.constant 0 : index
    %1 = vector.load %arg2[%c0_1, %c0_2] : memref<4x64xf32, #tpu.memory_space<vmem>>, vector<4x64xf32>
    %cst = arith.constant dense<0.000000e+00> : vector<8x64xf32>
    %2 = tpu.matmul %0, %1, %cst {dimension_numbers = #tpu.dot_dimension_numbers<[1], [0], [0], [1], [0, 0, 1, 1], [], []>} : vector<8x4xf32>, vector<4x64xf32>, vector<8x64xf32> -> vector<8x64xf32>
    %c0_3 = arith.constant 0 : index
    %c0_4 = arith.constant 0 : index
    %3 = vector.load %arg3[%c0_3, %c0_4] : memref<1x64xf32, #tpu.memory_space<vmem>>, vector<1x64xf32>
    %4 = vector.broadcast %3 : vector<1x64xf32> to vector<8x64xf32>
    %5 = arith.addf %2, %4 : vector<8x64xf32>
    %cst_5 = arith.constant 0.000000e+00 : f32
    %6 = vector.broadcast %cst_5 : f32 to vector<8x64xf32>
    %7 = arith.maximumf %5, %6 : vector<8x64xf32>
    %c0_6 = arith.constant 0 : index
    %c0_7 = arith.constant 0 : index
    %8 = vector.load %arg4[%c0_6, %c0_7] : memref<64x2xf32, #tpu.memory_space<vmem>>, vector<64x2xf32>
    %cst_8 = arith.constant dense<0.000000e+00> : vector<8x2xf32>
    %9 = tpu.matmul %7, %8, %cst_8 {dimension_numbers = #tpu.dot_dimension_numbers<[1], [0], [0], [1], [0, 0, 1, 1], [], []>} : vector<8x64xf32>, vector<64x2xf32>, vector<8x2xf32> -> vector<8x2xf32>
    %c0_9 = arith.constant 0 : index
    %c0_10 = arith.constant 0 : index
    %10 = vector.load %arg5[%c0_9, %c0_10] : memref<1x2xf32, #tpu.memory_space<vmem>>, vector<1x2xf32>
    %11 = vector.broadcast %10 : vector<1x2xf32> to vector<8x2xf32>
    %12 = arith.addf %9, %11 : vector<8x2xf32>
    %c0_11 = arith.constant 0 : index
    %c0_12 = arith.constant 0 : index
    %13 = vector.load %arg6[%c0_11, %c0_12] : memref<8x2xf32, #tpu.memory_space<vmem>>, vector<8x2xf32>
    tpu.vector_store %arg6[%c0_11, %c0_12], %12 {strides = array<i32>} : memref<8x2xf32, #tpu.memory_space<vmem>>, vector<8x2xf32>,
    %cst_13 = arith.constant dense<0xFF800000> : vector<8xf32>
    %14 = vector.multi_reduction <maximumf>, %12, %cst_13 [1] : vector<8x2xf32> to vector<8xf32>
    %15 = vector.shape_cast %14 : vector<8xf32> to vector<8x1xf32>
    %16 = tpu.iota {dimensions = array<i32: 1>} : vector<8x2xi32>
    %17 = vector.broadcast %15 : vector<8x1xf32> to vector<8x2xf32>
    %18 = arith.cmpf oeq, %12, %17 : vector<8x2xf32>
    %c2_i32 = arith.constant 2 : i32
    %19 = vector.broadcast %c2_i32 : i32 to vector<8x2xi32>
    %20 = arith.select %18, %16, %19 : vector<8x2xi1>, vector<8x2xi32>
    %cst_14 = arith.constant dense<2147483647> : vector<8xi32>
    %21 = vector.multi_reduction <minsi>, %20, %cst_14 [1] : vector<8x2xi32> to vector<8xi32>
    %22 = vector.shape_cast %21 : vector<8xi32> to vector<8x1xi32>
    %c0_15 = arith.constant 0 : index
    %c0_16 = arith.constant 0 : index
    %23 = vector.load %arg7[%c0_15, %c0_16] : memref<8x1xi32, #tpu.memory_space<vmem>>, vector<8x1xi32>
    tpu.vector_store %arg7[%c0_15, %c0_16], %22 {strides = array<i32>} : memref<8x1xi32, #tpu.memory_space<vmem>>, vector<8x1xi32>,
    return
  }
  func.func @transform_0(%arg0: i32) -> (i32, i32) {
    %c0_i32 = arith.constant 0 : i32
    %c0_i32_0 = arith.constant 0 : i32
    return %arg0, %c0_i32 : i32, i32
  }
  func.func @transform_1(%arg0: i32) -> (i32, i32) {
    %c0_i32 = arith.constant 0 : i32
    %c0_i32_0 = arith.constant 0 : i32
    %c0_i32_1 = arith.constant 0 : i32
    return %c0_i32, %c0_i32_0 : i32, i32
  }
  func.func @transform_2(%arg0: i32) -> (i32, i32) {
    %c0_i32 = arith.constant 0 : i32
    %c0_i32_0 = arith.constant 0 : i32
    %c0_i32_1 = arith.constant 0 : i32
    return %c0_i32, %c0_i32_0 : i32, i32
  }
  func.func @transform_3(%arg0: i32) -> (i32, i32) {
    %c0_i32 = arith.constant 0 : i32
    %c0_i32_0 = arith.constant 0 : i32
    %c0_i32_1 = arith.constant 0 : i32
    return %c0_i32, %c0_i32_0 : i32, i32
  }
  func.func @transform_4(%arg0: i32) -> (i32, i32) {
    %c0_i32 = arith.constant 0 : i32
    %c0_i32_0 = arith.constant 0 : i32
    %c0_i32_1 = arith.constant 0 : i32
    return %c0_i32, %c0_i32_0 : i32, i32
  }
  func.func @transform_5(%arg0: i32) -> (i32, i32) {
    %c0_i32 = arith.constant 0 : i32
    %c0_i32_0 = arith.constant 0 : i32
    return %arg0, %c0_i32 : i32, i32
  }
  func.func @transform_6(%arg0: i32) -> (i32, i32) {
    %c0_i32 = arith.constant 0 : i32
    %c0_i32_0 = arith.constant 0 : i32
    return %arg0, %c0_i32 : i32, i32
  }
}

</mosaic_0001>

<llo_original>
// kernel: tpu_custom_call.1
$region0: #{tpu_custom_call.1}
  #allocation0 [shape = 'u32[]', space=smem, size = 0x4, offset = 0x4, fixed_abs, tag = 'smem constant byte address 0x4 - core index']
  #allocation1 [shape = 'u32[72,128]{1,0:T(1,128)}', space=vmem, size = 0x9000, scoped, tag = 'internal scratch']
  %s0 = inlined_call_operand.vmem [shape: f32[8,4], index: 0, kind: input, shape index: {}]
  %s1 = inlined_call_operand.vmem [shape: f32[4,64], index: 1, kind: input, shape index: {}]
  %s2 = inlined_call_operand.vmem [shape: f32[1,64], index: 2, kind: input, shape index: {}]
  %s3 = inlined_call_operand.vmem [shape: f32[64,2], index: 3, kind: input, shape index: {}]
  %s4 = inlined_call_operand.vmem [shape: f32[1,2], index: 4, kind: input, shape index: {}]
  %s5 = inlined_call_operand.vmem [shape: f32[8,2], index: 5, kind: output, shape index: {0}]
  %s6 = inlined_call_operand.vmem [shape: s32[8,1], index: 6, kind: output, shape index: {1}]
  %7 = xla_tuple %s5, %s6
  %s8 = sld [smem:[#allocation0]]
  $region38: #{tpu_custom_call.1} parent=0
    _
  %s10 = ssub.s32 1, %s8
  %s11 = scalar_select 0, %s10, %s8
  // Predicated region
  $region2: #{tpu_custom_call.1} parent=0 // pred_check
    _
  $region3: #{tpu_custom_call.1} parent=0 // pred_check_branch
    %13 = sbr.rel (0) target = $region5
  $region4: #{tpu_custom_call.1} parent=0 // pred_region
    _
  $region5: #{tpu_custom_call.1} parent=0 // pred_fallthru
    _
  // Predicated region
  $region6: #{tpu_custom_call.1} parent=0 // pred_check
    _
  $region7: #{tpu_custom_call.1} parent=0 // pred_check_branch
    %15 = sbr.rel (0) target = $region9
  $region8: #{tpu_custom_call.1} parent=0 // pred_region
    _
  $region9: #{tpu_custom_call.1} parent=0 // pred_fallthru
    _
  // Predicated region
  $region10: #{tpu_custom_call.1} parent=0 // pred_check
    _
  $region11: #{tpu_custom_call.1} parent=0 // pred_check_branch
    %17 = sbr.rel (0) target = $region13
  $region12: #{tpu_custom_call.1} parent=0 // pred_region
    _
  $region13: #{tpu_custom_call.1} parent=0 // pred_fallthru
    _
  // Predicated region
  $region14: #{tpu_custom_call.1} parent=0 // pred_check
    _
  $region15: #{tpu_custom_call.1} parent=0 // pred_check_branch
    %19 = sbr.rel (0) target = $region17
  $region16: #{tpu_custom_call.1} parent=0 // pred_region
    _
  $region17: #{tpu_custom_call.1} parent=0 // pred_fallthru
    _
  // Predicated region
  $region18: #{tpu_custom_call.1} parent=0 // pred_check
    _
  $region19: #{tpu_custom_call.1} parent=0 // pred_check_branch
    %21 = sbr.rel (0) target = $region21
  $region20: #{tpu_custom_call.1} parent=0 // pred_region
    _
  $region21: #{tpu_custom_call.1} parent=0 // pred_fallthru
    _
  %v22 = vld [vmem:[%s0] sm:$0xff]
  %v23 = vld [vmem:[%s1] sm:$0xf]
  %v24 = vld [vmem:[%s2] sm:$0x1]
  %v26 = vperm.slane %v24, 0
  %vm28 = vcmask 31744
  %v30 = vsel %vm28, %v22, 0
  %vm32 = vcmask 1043456
  %v34 = vsel %vm32, %v23, 0
  %36 = vmatpush.msra.mxu0 0.0
  %37 = vmatpush.msra.mxu0 0.0
  %38 = vmatpush.msra.mxu0 0.0
  %39 = vmatpush.msra.mxu0 0.0
  %40 = vmatpush.msra.mxu0 0.0
  %41 = vmatpush.msra.mxu0 0.0
  %42 = vmatpush.msra.mxu0 0.0
  %43 = vmatpush.msra.mxu0 0.0
  %44 = vmatpush.msra.mxu0 0.0
  %45 = vmatpush.msra.mxu0 0.0
  %46 = vmatpush.msra.mxu0 0.0
  %47 = vmatpush.msra.mxu0 0.0
  %48 = vmatpush.msra.mxu0 0.0
  %49 = vmatpush.msra.mxu0 0.0
  %50 = vmatpush.msra.mxu0 0.0
  %51 = vmatpush.msra.mxu0 %v34
  %52 = vmatmul.f32.gmra.mxu0 %v30
  %v53 = vpop.f32.mrf.mxu0
  %v54 = vadd.f32 %v26, %v53
  %55 = vdwg.mxu0
  %v56 = vmax.f32 %v54, 0.0
  %v57 = vld [vmem:[%s3] sm:$0xff]
  %v58 = vld [vmem:[%s3 + $0x8] sm:$0xff]
  %v59 = vld [vmem:[%s3 + $0x10] sm:$0xff]
  %v60 = vld [vmem:[%s3 + $0x18] sm:$0xff]
  %v61 = vld [vmem:[%s3 + $0x20] sm:$0xff]
  %v62 = vld [vmem:[%s3 + $0x28] sm:$0xff]
  %v63 = vld [vmem:[%s3 + $0x30] sm:$0xff]
  %v64 = vld [vmem:[%s3 + $0x38] sm:$0xff]
  %v65 = vld [vmem:[%s4] sm:$0x1]
  %v67 = vperm.slane %v65, 0
  %vm69 = vcmask 523264
  %v71 = vsel %vm69, %v56, 0
  %73 = vmatpush.msra.mxu0 0.0
  %74 = vmatpush.msra.mxu0 0.0
  %75 = vmatpush.msra.mxu0 0.0
  %76 = vmatpush.msra.mxu0 0.0
  %77 = vmatpush.msra.mxu0 0.0
  %78 = vmatpush.msra.mxu0 0.0
  %79 = vmatpush.msra.mxu0 0.0
  %80 = vmatpush.msra.mxu0 0.0
  %81 = vmatpush.msra.mxu0 %v64
  %82 = vmatpush.msra.mxu0 %v63
  %83 = vmatpush.msra.mxu0 %v62
  %84 = vmatpush.msra.mxu0 %v61
  %85 = vmatpush.msra.mxu0 %v60
  %86 = vmatpush.msra.mxu0 %v59
  %87 = vmatpush.msra.mxu0 %v58
  %88 = vmatpush.msra.mxu0 %v57
  %89 = vmatmul.f32.gmra.mxu0 %v71
  %v90 = vpop.f32.mrf.mxu0
  %v91 = vadd.f32 %v67, %v90
  %92 = vdwg.mxu0
  %vm93 = vcmask 15360
  %94 = vst.msk [vmem:[%s5] sm:$0xff] %vm93, %v91
  %v95 = vsel %vm93, %v91, -inf
  %96 = vmax.xlane.f32.xlu0 %v95
  %v97 = vpop.xlane.xlu0 %96
  %v98 = vlaneseq
  %v99 = vand.u32 %v98, 127
  %vm100 = vcmp.eq.f32.partialorder %v91, %v97
  %v101 = vsel %vm100, %v99, 2
  %v102 = vsel %vm93, %v101, 2147483647
  %v103 = vand.u32 %v102, 65535
  %v104 = vshra.s32 %v102, 16
  %v105 = vcvt.s32.f32 %v103
  %v106 = vcvt.s32.f32 %v104
  %107 = vmin.xlane.f32.xlu0 %v106
  %v108 = vpop.xlane.xlu0 %107
  %vm109 = vcmp.eq.f32.partialorder %v106, %v108
  %v110 = vsel %vm109, %v105, inf
  %111 = vmin.xlane.f32.xlu0 %v110
  %v112 = vpop.xlane.xlu0 %111
  %v113 = vcvt.f32.s32 %v112
  %v114 = vcvt.f32.s32 %v108
  %v115 = vshll.u32 %v114, 16
  %v116 = vadd.s32 %v115, %v113
  %vm117 = vcmask 7168
  %118 = vst.msk [vmem:[%s6] sm:$0xff] %vm117, %v116
  // Predicated region
  $region22: #{tpu_custom_call.1} parent=0 // pred_check
    _
  $region23: #{tpu_custom_call.1} parent=0 // pred_check_branch
    %120 = sbr.rel (0) target = $region25
  $region24: #{tpu_custom_call.1} parent=0 // pred_region
    _
  $region25: #{tpu_custom_call.1} parent=0 // pred_fallthru
    _
  // Predicated region
  $region26: #{tpu_custom_call.1} parent=0 // pred_check
    _
  $region27: #{tpu_custom_call.1} parent=0 // pred_check_branch
    %122 = sbr.rel (0) target = $region29
  $region28: #{tpu_custom_call.1} parent=0 // pred_region
    _
  $region29: #{tpu_custom_call.1} parent=0 // pred_fallthru
    _
  // Predicated region
  $region30: #{tpu_custom_call.1} parent=0 // pred_check
    _
  $region31: #{tpu_custom_call.1} parent=0 // pred_check_branch
    %124 = sbr.rel (0) target = $region33
  $region32: #{tpu_custom_call.1} parent=0 // pred_region
    _
  $region33: #{tpu_custom_call.1} parent=0 // pred_fallthru
    _
  // Predicated region
  $region34: #{tpu_custom_call.1} parent=0 // pred_check
    _
  $region35: #{tpu_custom_call.1} parent=0 // pred_check_branch
    %126 = sbr.rel (0) target = $region37
  $region36: #{tpu_custom_call.1} parent=0 // pred_region
    _
  $region37: #{tpu_custom_call.1} parent=0 // pred_fallthru
    _

</llo_original>
